<compile_context>
chip_gen: v7x
topology: tpu7x:2x2x1
jax: 0.10.0
libtpu: 0.0.40
codegen_flags: <defaults>
</compile_context>

<pallas_src>
import functools

import numpy as np
import jax
import jax.numpy as jnp
from jax.experimental import pallas as pl
from jax.experimental.pallas import tpu as pltpu

HIDDEN = 128
MAX_TM = 2048   # column tile (one MLP row per lane); amortizes per-step overhead.


def _round_up(x, n):
    return -(-x // n) * n


def _choose_tile(m):
    """Balanced column tiling. Returns (tm, num_tiles)."""
    if m < 512:
        return m, 1                       # single full-extent tile
    num_tiles = max(2, -(-m // MAX_TM))   # >=2 tiles so both v7x TCs get work
    tm = _round_up(-(-m // num_tiles), 128)
    num_tiles = -(-m // tm)               # re-derive: last tile always intersects M
    return tm, num_tiles


def _mlp_kernel(x_ref, w1_ref, w2_ref, w3_ref, w4_ref, bias_ref, o_ref):
    # x_ref: (K1, TM) bf16 feature-major tile; each column is one MLP row.
    # Layer 1: bias folded into W1 via the ones-row appended to x.
    h = jnp.dot(w1_ref[...], x_ref[...], preferred_element_type=jnp.float32)
    h = jnp.maximum(h, 0.0).astype(jnp.bfloat16)
    # Layers 2-3: bf16 MXU matmuls, f32 accumulation, f32 bias/ReLU.
    h = jnp.dot(w2_ref[...], h, preferred_element_type=jnp.float32) + bias_ref[:, 0:1]
    h = jnp.maximum(h, 0.0).astype(jnp.bfloat16)
    h = jnp.dot(w3_ref[...], h, preferred_element_type=jnp.float32) + bias_ref[:, 1:2]
    h = jnp.maximum(h, 0.0).astype(jnp.bfloat16)
    # 128 -> 1 head as a 1-row MXU matmul; result is a lane-dense (1, TM) row.
    out = jnp.dot(w4_ref[...], h, preferred_element_type=jnp.float32) + bias_ref[0:1, 2:3]
    o_ref[...] = jnp.tanh(out)


def mlp_pallas(x_aug, packed):
    """x_aug: (K1, M) bf16 feature-major (with ones-row + zero pad rows).
    Returns (M,) float32."""
    k1, m = x_aug.shape
    tm, num_tiles = _choose_tile(m)

    w1, w2, w3, w4, bias = (packed["w1"], packed["w2"], packed["w3"],
                            packed["w4"], packed["bias"])
    out = pl.pallas_call(
        _mlp_kernel,
        out_shape=jax.ShapeDtypeStruct((1, num_tiles * tm), jnp.float32),
        grid_spec=pltpu.PrefetchScalarGridSpec(
            num_scalar_prefetch=0,
            grid=(num_tiles,),
            in_specs=[
                pl.BlockSpec((k1, tm), lambda i: (0, i)),
                # Constant index_maps -> fetched once, resident in VMEM.
                pl.BlockSpec(w1.shape, lambda i: (0, 0)),
                pl.BlockSpec(w2.shape, lambda i: (0, 0)),
                pl.BlockSpec(w3.shape, lambda i: (0, 0)),
                pl.BlockSpec(w4.shape, lambda i: (0, 0)),
                pl.BlockSpec(bias.shape, lambda i: (0, 0)),
            ],
            out_specs=pl.BlockSpec((1, tm), lambda i: (0, i)),
        ),
        compiler_params=pltpu.CompilerParams(
            dimension_semantics=("parallel",)),
    )(x_aug, w1, w2, w3, w4, bias)
    # Boundary-tile garbage columns (if M % tm != 0) are dropped here.
    return out[0, :m]


def init_params(key, input_size):
    """Orthogonal init (gain sqrt(2)); PyTorch nn.Linear (out, in) orientation,
    biases initialized to 0 (as in the module)."""
    orth = jax.nn.initializers.orthogonal(scale=float(np.sqrt(2.0)))
    ks = jax.random.split(key, 4)
    return {
        "w1": orth(ks[0], (HIDDEN, input_size), jnp.float32),
        "b1": jnp.zeros((HIDDEN,), jnp.float32),
        "w2": orth(ks[1], (HIDDEN, HIDDEN), jnp.float32),
        "b2": jnp.zeros((HIDDEN,), jnp.float32),
        "w3": orth(ks[2], (HIDDEN, HIDDEN), jnp.float32),
        "b3": jnp.zeros((HIDDEN,), jnp.float32),
        "w4": orth(ks[3], (1, HIDDEN), jnp.float32),
        "b4": jnp.zeros((), jnp.float32),
    }


def pack_params(params):
    """Kernel-side operand packing:
      w1: (128, K1) bf16  with bias column folded in + zero pad to K1 = rup(d_in+1, 8)
      w2,w3: (128,128) bf16 ; w4: (1,128) bf16
      bias: (128, 4) f32  [col0=b2, col1=b3, col2=b4 (broadcast)]"""
    d_in = params["w1"].shape[1]
    k1 = _round_up(d_in + 1, 8)
    w1_aug = jnp.zeros((HIDDEN, k1), jnp.float32)
    w1_aug = w1_aug.at[:, :d_in].set(params["w1"]).at[:, d_in].set(params["b1"])
    bias = jnp.zeros((HIDDEN, 4), jnp.float32)
    bias = (bias.at[:, 0].set(params["b2"])
                .at[:, 1].set(params["b3"])
                .at[:, 2].set(params["b4"]))
    return {
        "w1": w1_aug.astype(jnp.bfloat16),
        "w2": params["w2"].astype(jnp.bfloat16),
        "w3": params["w3"].astype(jnp.bfloat16),
        "w4": params["w4"].astype(jnp.bfloat16),
        "bias": bias,
    }


@jax.jit
def mlp_forward(inputs, z, packed):
    """Replicates MLP.forward(inputs, z, infer=False). Returns (seq, nenv)."""
    nodes = inputs["pretext_nodes"]            # (seq, nenv, Fn)
    edges = inputs["pretext_spatial_edges"]    # (seq, nenv, Fe)
    seq, nenv = nodes.shape[0], nodes.shape[1]
    latent = z.shape[-1]
    d_in = 2 + latent
    k1 = packed["w1"].shape[1]
    m = seq * nenv
    # Feature-major (K1, M) slab with t-major row order (col = t*nenv + e):
    # node/edge features flatten with no transpose, and the kernel output
    # reshapes directly to (seq, nenv) -- no output transpose needed.
    f_node = nodes[:, :, 0].astype(jnp.bfloat16).reshape(1, m)
    f_edge = edges[:, :, 0].astype(jnp.bfloat16).reshape(1, m)
    z_t = jnp.transpose(z.astype(jnp.bfloat16), (2, 0, 1)).reshape(latent, m)
    ones = jnp.ones((1, m), jnp.bfloat16)                    # folded layer-1 bias row
    pad = jnp.zeros((k1 - d_in - 1, m), jnp.bfloat16)        # K padding to multiple of 8
    x_aug = jnp.concatenate([f_node, f_edge, z_t, ones, pad], axis=0)   # (K1, M)

    s_flat = mlp_pallas(x_aug, packed)                       # (M,)
    return s_flat.reshape(seq, nenv)                         # == x.permute(1,0,2).squeeze(-1)


def mlp_reference(inputs, z, params):
    """Pure-JAX f32 reference for correctness check (mirrors the torch module)."""
    robot_node = jnp.transpose(inputs["pretext_nodes"], (1, 0, 2))
    spatial_edges = jnp.transpose(inputs["pretext_spatial_edges"], (1, 0, 2))
    z_p = jnp.transpose(z, (1, 0, 2))
    h = jnp.concatenate([robot_node[:, :, 0:1], spatial_edges[:, :, 0:1], z_p], axis=-1)
    h = jax.nn.relu(h @ params["w1"].T + params["b1"])
    h = jax.nn.relu(h @ params["w2"].T + params["b2"])
    h = jax.nn.relu(h @ params["w3"].T + params["b3"])
    s = jnp.tanh(h @ params["w4"].T + params["b4"])
    return jnp.transpose(s, (1, 0, 2))[..., 0]               # (seq, nenv)


def _run_case(seq_length, nenv, latent_size, key):
    node_feat = 2   # only feature 0 is used
    edge_feat = 2   # only feature 0 is used
    input_size = 2 + latent_size
    k_nodes, k_edges, k_z, k_params, k_bias = jax.random.split(key, 5)
    inputs = {
        "pretext_nodes": jax.random.normal(k_nodes, (seq_length, nenv, node_feat), jnp.float32),
        "pretext_spatial_edges": jax.random.normal(k_edges, (seq_length, nenv, edge_feat), jnp.float32),
    }
    z = jax.random.normal(k_z, (seq_length, nenv, latent_size), jnp.float32)
    params = init_params(k_params, input_size)
    # The module inits biases to 0; perturb them here only so the test
    # exercises the folded / packed bias paths in the kernel.
    kb = jax.random.split(k_bias, 4)
    params["b1"] = 0.1 * jax.random.normal(kb[0], (HIDDEN,), jnp.float32)
    params["b2"] = 0.1 * jax.random.normal(kb[1], (HIDDEN,), jnp.float32)
    params["b3"] = 0.1 * jax.random.normal(kb[2], (HIDDEN,), jnp.float32)
    params["b4"] = 0.1 * jax.random.normal(kb[3], (), jnp.float32)
    packed = pack_params(params)

    out = jax.block_until_ready(mlp_forward(inputs, z, packed))
    ref = np.asarray(mlp_reference(inputs, z, params))
    out = np.asarray(out)
    assert out.shape == (seq_length, nenv), out.shape
    # bf16 MXU operands (3x 128-deep contractions, f32 accumulation) => expect
    # ~1e-3..1e-2 absolute error on the tanh output; real semantics bugs are O(0.5).
    np.testing.assert_allclose(out, ref, rtol=5e-2, atol=5e-2)
    assert float(np.mean(np.abs(out - ref))) < 1.5e-2


if __name__ == "__main__":
    key = jax.random.PRNGKey(0)
    k1, k2 = jax.random.split(key)

    # Small shapes consistent with the module (single-tile, grid=1 path).
    _run_case(seq_length=8, nenv=2, latent_size=8, key=k1)
    # Larger, non-tile-multiple row count (M=630): exercises the balanced
    # multi-tile grid (2 tiles of 384 cols) and the partial boundary tile.
    _run_case(seq_length=9, nenv=70, latent_size=8, key=k2)

    print("KERNEL_OK")
</pallas_src>

<mosaic_0001>
module attributes {stable_mosaic.version = 11 : i64} {
  func.func @_mlp_kernel(%arg0: i32, %arg1: memref<16x16xbf16, #tpu.memory_space<vmem>>, %arg2: memref<128x16xbf16, #tpu.memory_space<vmem>>, %arg3: memref<128x128xbf16, #tpu.memory_space<vmem>>, %arg4: memref<128x128xbf16, #tpu.memory_space<vmem>>, %arg5: memref<1x128xbf16, #tpu.memory_space<vmem>>, %arg6: memref<128x4xf32, #tpu.memory_space<vmem>>, %arg7: memref<1x16xf32, #tpu.memory_space<vmem>>) attributes {dimension_semantics = [#tpu.dimension_semantics<parallel>], iteration_bounds = array<i64: 1>, scalar_prefetch = 0 : i64, scratch_operands = 0 : i64, tpu.core_type = #tpu.core_type<tc>, window_params = [{transform_indices = @transform_0, window_bounds = array<i64: 16, 16>}, {pipeline_mode = #tpu.pipeline_mode<synchronous>, transform_indices = @transform_1, window_bounds = array<i64: 128, 16>}, {pipeline_mode = #tpu.pipeline_mode<synchronous>, transform_indices = @transform_2, window_bounds = array<i64: 128, 128>}, {pipeline_mode = #tpu.pipeline_mode<synchronous>, transform_indices = @transform_3, window_bounds = array<i64: 128, 128>}, {pipeline_mode = #tpu.pipeline_mode<synchronous>, transform_indices = @transform_4, window_bounds = array<i64: 1, 128>}, {pipeline_mode = #tpu.pipeline_mode<synchronous>, transform_indices = @transform_5, window_bounds = array<i64: 128, 4>}, {transform_indices = @transform_6, window_bounds = array<i64: 1, 16>}]} {
    %c0 = arith.constant 0 : index
    %c0_0 = arith.constant 0 : index
    %0 = vector.load %arg2[%c0, %c0_0] : memref<128x16xbf16, #tpu.memory_space<vmem>>, vector<128x16xbf16>
    %c0_1 = arith.constant 0 : index
    %c0_2 = arith.constant 0 : index
    %1 = vector.load %arg1[%c0_1, %c0_2] : memref<16x16xbf16, #tpu.memory_space<vmem>>, vector<16x16xbf16>
    %cst = arith.constant dense<0.000000e+00> : vector<128x16xf32>
    %2 = tpu.matmul %0, %1, %cst {dimension_numbers = #tpu.dot_dimension_numbers<[1], [0], [0], [1], [0, 0, 1, 1], [], []>} : vector<128x16xbf16>, vector<16x16xbf16>, vector<128x16xf32> -> vector<128x16xf32>
    %cst_3 = arith.constant 0.000000e+00 : f32
    %3 = vector.broadcast %cst_3 : f32 to vector<128x16xf32>
    %4 = arith.maximumf %2, %3 : vector<128x16xf32>
    %5 = arith.truncf %4 : vector<128x16xf32> to vector<128x16xbf16>
    %c0_4 = arith.constant 0 : index
    %c0_5 = arith.constant 0 : index
    %6 = vector.load %arg3[%c0_4, %c0_5] : memref<128x128xbf16, #tpu.memory_space<vmem>>, vector<128x128xbf16>
    %cst_6 = arith.constant dense<0.000000e+00> : vector<128x16xf32>
    %7 = tpu.matmul %6, %5, %cst_6 {dimension_numbers = #tpu.dot_dimension_numbers<[1], [0], [0], [1], [0, 0, 1, 1], [], []>} : vector<128x128xbf16>, vector<128x16xbf16>, vector<128x16xf32> -> vector<128x16xf32>
    %c0_7 = arith.constant 0 : index
    %c0_8 = arith.constant 0 : index
    %8 = vector.load %arg6[%c0_7, %c0_8] : memref<128x4xf32, #tpu.memory_space<vmem>>, vector<128x1xf32>
    %9 = vector.broadcast %8 : vector<128x1xf32> to vector<128x16xf32>
    %10 = arith.addf %7, %9 : vector<128x16xf32>
    %cst_9 = arith.constant 0.000000e+00 : f32
    %11 = vector.broadcast %cst_9 : f32 to vector<128x16xf32>
    %12 = arith.maximumf %10, %11 : vector<128x16xf32>
    %13 = arith.truncf %12 : vector<128x16xf32> to vector<128x16xbf16>
    %c0_10 = arith.constant 0 : index
    %c0_11 = arith.constant 0 : index
    %14 = vector.load %arg4[%c0_10, %c0_11] : memref<128x128xbf16, #tpu.memory_space<vmem>>, vector<128x128xbf16>
    %cst_12 = arith.constant dense<0.000000e+00> : vector<128x16xf32>
    %15 = tpu.matmul %14, %13, %cst_12 {dimension_numbers = #tpu.dot_dimension_numbers<[1], [0], [0], [1], [0, 0, 1, 1], [], []>} : vector<128x128xbf16>, vector<128x16xbf16>, vector<128x16xf32> -> vector<128x16xf32>
    %c0_13 = arith.constant 0 : index
    %c1 = arith.constant 1 : index
    %16 = vector.load %arg6[%c0_13, %c1] : memref<128x4xf32, #tpu.memory_space<vmem>>, vector<128x1xf32>
    %17 = vector.broadcast %16 : vector<128x1xf32> to vector<128x16xf32>
    %18 = arith.addf %15, %17 : vector<128x16xf32>
    %cst_14 = arith.constant 0.000000e+00 : f32
    %19 = vector.broadcast %cst_14 : f32 to vector<128x16xf32>
    %20 = arith.maximumf %18, %19 : vector<128x16xf32>
    %21 = arith.truncf %20 : vector<128x16xf32> to vector<128x16xbf16>
    %c0_15 = arith.constant 0 : index
    %c0_16 = arith.constant 0 : index
    %22 = vector.load %arg5[%c0_15, %c0_16] : memref<1x128xbf16, #tpu.memory_space<vmem>>, vector<1x128xbf16>
    %cst_17 = arith.constant dense<0.000000e+00> : vector<1x16xf32>
    %23 = tpu.matmul %22, %21, %cst_17 {dimension_numbers = #tpu.dot_dimension_numbers<[1], [0], [0], [1], [0, 0, 1, 1], [], []>} : vector<1x128xbf16>, vector<128x16xbf16>, vector<1x16xf32> -> vector<1x16xf32>
    %c0_18 = arith.constant 0 : index
    %c2 = arith.constant 2 : index
    %24 = vector.load %arg6[%c0_18, %c2] : memref<128x4xf32, #tpu.memory_space<vmem>>, vector<1x1xf32>
    %25 = vector.broadcast %24 : vector<1x1xf32> to vector<1x16xf32>
    %26 = arith.addf %23, %25 : vector<1x16xf32>
    %27 = math.tanh %26 : vector<1x16xf32>
    %c0_19 = arith.constant 0 : index
    %c0_20 = arith.constant 0 : index
    %28 = vector.load %arg7[%c0_19, %c0_20] : memref<1x16xf32, #tpu.memory_space<vmem>>, vector<1x16xf32>
    tpu.vector_store %arg7[%c0_19, %c0_20], %27 {strides = array<i32>} : memref<1x16xf32, #tpu.memory_space<vmem>>, vector<1x16xf32>,
    return
  }
  func.func @transform_0(%arg0: i32) -> (i32, i32) {
    %c0_i32 = arith.constant 0 : i32
    %c0_i32_0 = arith.constant 0 : i32
    return %c0_i32, %arg0 : i32, i32
  }
  func.func @transform_1(%arg0: i32) -> (i32, i32) {
    %c0_i32 = arith.constant 0 : i32
    %c0_i32_0 = arith.constant 0 : i32
    %c0_i32_1 = arith.constant 0 : i32
    return %c0_i32, %c0_i32_0 : i32, i32
  }
  func.func @transform_2(%arg0: i32) -> (i32, i32) {
    %c0_i32 = arith.constant 0 : i32
    %c0_i32_0 = arith.constant 0 : i32
    %c0_i32_1 = arith.constant 0 : i32
    return %c0_i32, %c0_i32_0 : i32, i32
  }
  func.func @transform_3(%arg0: i32) -> (i32, i32) {
    %c0_i32 = arith.constant 0 : i32
    %c0_i32_0 = arith.constant 0 : i32
    %c0_i32_1 = arith.constant 0 : i32
    return %c0_i32, %c0_i32_0 : i32, i32
  }
  func.func @transform_4(%arg0: i32) -> (i32, i32) {
    %c0_i32 = arith.constant 0 : i32
    %c0_i32_0 = arith.constant 0 : i32
    %c0_i32_1 = arith.constant 0 : i32
    return %c0_i32, %c0_i32_0 : i32, i32
  }
  func.func @transform_5(%arg0: i32) -> (i32, i32) {
    %c0_i32 = arith.constant 0 : i32
    %c0_i32_0 = arith.constant 0 : i32
    %c0_i32_1 = arith.constant 0 : i32
    return %c0_i32, %c0_i32_0 : i32, i32
  }
  func.func @transform_6(%arg0: i32) -> (i32, i32) {
    %c0_i32 = arith.constant 0 : i32
    %c0_i32_0 = arith.constant 0 : i32
    return %c0_i32, %arg0 : i32, i32
  }
}

</mosaic_0001>

<llo_original>
// kernel: squeeze.5
$region0: #{squeeze.5}
  %s0 = inlined_call_operand.vmem [shape: f32[16], index: 0, kind: input, shape index: {}]
  %s1 = inlined_call_operand.vmem [shape: f32[8,2], index: 1, kind: output, shape index: {}]
  $region1: #{squeeze.5} parent=0
    #allocation0 [shape = 'u8[4096]{0}', space=vmem, size = 0x1000, scoped, tag = 'scoped mem for input reshape']
    %s3 = sshllo.u32 0, 1
    %v4 = vld [vmem:[%s0] sm:%s3]
    %5 = vst [vmem:[#allocation0] sm:%s3] %v4
    %v6 = vld [vmem:[#allocation0] sm:$0x1]
    %vm7 = vcmask 15360
    %8 = vst.msk [vmem:[%s1] sm:$0x1] %vm7, %v6
    %v9 = vld [vmem:[#allocation0] sm:$0x1]
    %10 = vrot.lane.b32.xlu0 %v9, 126
    %v11 = vpop.permute.xlu0 %10
    %vm12 = vcmask 15360
    %s13 = scalar_lea.vmem %s1, 1
    %14 = vst.msk [vmem:[%s13] sm:$0x1] %vm12, %v11
    %v15 = vld [vmem:[#allocation0] sm:$0x1]
    %16 = vrot.lane.b32.xlu0 %v15, 124
    %v17 = vpop.permute.xlu0 %16
    %vm18 = vcmask 15360
    %s19 = scalar_lea.vmem %s1, 2
    %20 = vst.msk [vmem:[%s19] sm:$0x1] %vm18, %v17
    %v21 = vld [vmem:[#allocation0] sm:$0x1]
    %22 = vrot.lane.b32.xlu0 %v21, 122
    %v23 = vpop.permute.xlu0 %22
    %vm24 = vcmask 15360
    %s25 = scalar_lea.vmem %s1, 3
    %26 = vst.msk [vmem:[%s25] sm:$0x1] %vm24, %v23
    %v27 = vld [vmem:[#allocation0] sm:$0x1]
    %28 = vrot.lane.b32.xlu0 %v27, 120
    %v29 = vpop.permute.xlu0 %28
    %vm30 = vcmask 15360
    %s31 = scalar_lea.vmem %s1, 4
    %32 = vst.msk [vmem:[%s31] sm:$0x1] %vm30, %v29
    %v33 = vld [vmem:[#allocation0] sm:$0x1]
    %34 = vrot.lane.b32.xlu0 %v33, 118
    %v35 = vpop.permute.xlu0 %34
    %vm36 = vcmask 15360
    %s37 = scalar_lea.vmem %s1, 5
    %38 = vst.msk [vmem:[%s37] sm:$0x1] %vm36, %v35
    %v39 = vld [vmem:[#allocation0] sm:$0x1]
    %40 = vrot.lane.b32.xlu0 %v39, 116
    %v41 = vpop.permute.xlu0 %40
    %vm42 = vcmask 15360
    %s43 = scalar_lea.vmem %s1, 6
    %44 = vst.msk [vmem:[%s43] sm:$0x1] %vm42, %v41
    %v45 = vld [vmem:[#allocation0] sm:$0x1]
    %46 = vrot.lane.b32.xlu0 %v45, 114
    %v47 = vpop.permute.xlu0 %46
    %vm48 = vcmask 15360
    %s49 = scalar_lea.vmem %s1, 7
    %50 = vst.msk [vmem:[%s49] sm:$0x1] %vm48, %v47

// kernel: mlp_forward.1
$region0: #{mlp_forward.1}
  #allocation0 [shape = 'u32[]', space=smem, size = 0x4, offset = 0x4, fixed_abs, tag = 'smem constant byte address 0x4 - core index']
  #allocation1 [shape = 'u32[144,128]{1,0:T(1,128)}', space=vmem, size = 0x12000, scoped, tag = 'internal scratch']
  %s0 = inlined_call_operand.vmem [shape: bf16[16,16], index: 0, kind: input, shape index: {}]
  %s1 = inlined_call_operand.vmem [shape: bf16[128,16], index: 1, kind: input, shape index: {}]
  %s2 = inlined_call_operand.vmem [shape: bf16[128,128], index: 2, kind: input, shape index: {}]
  %s3 = inlined_call_operand.vmem [shape: bf16[128,128], index: 3, kind: input, shape index: {}]
  %s4 = inlined_call_operand.vmem [shape: bf16[1,128], index: 4, kind: input, shape index: {}]
  %s5 = inlined_call_operand.vmem [shape: f32[128,4], index: 5, kind: input, shape index: {}]
  %s6 = inlined_call_operand.vmem [shape: f32[1,16], index: 6, kind: output, shape index: {}]
  %s7 = sld [smem:[#allocation0]]
  $region34: #{mlp_forward.1} parent=0
    _
  %s9 = ssub.s32 1, %s7
  %s10 = scalar_select 0, %s9, %s7
  // Predicated region
  $region2: #{mlp_forward.1} parent=0 // pred_check
    _
  $region3: #{mlp_forward.1} parent=0 // pred_check_branch
    %12 = sbr.rel (0) target = $region5
  $region4: #{mlp_forward.1} parent=0 // pred_region
    _
  $region5: #{mlp_forward.1} parent=0 // pred_fallthru
    _
  // Predicated region
  $region6: #{mlp_forward.1} parent=0 // pred_check
    _
  $region7: #{mlp_forward.1} parent=0 // pred_check_branch
    %14 = sbr.rel (0) target = $region9
  $region8: #{mlp_forward.1} parent=0 // pred_region
    _
  $region9: #{mlp_forward.1} parent=0 // pred_fallthru
    _
  // Predicated region
  $region10: #{mlp_forward.1} parent=0 // pred_check
    _
  $region11: #{mlp_forward.1} parent=0 // pred_check_branch
    %16 = sbr.rel (0) target = $region13
  $region12: #{mlp_forward.1} parent=0 // pred_region
    _
  $region13: #{mlp_forward.1} parent=0 // pred_fallthru
    _
  // Predicated region
  $region14: #{mlp_forward.1} parent=0 // pred_check
    _
  $region15: #{mlp_forward.1} parent=0 // pred_check_branch
    %18 = sbr.rel (0) target = $region17
  $region16: #{mlp_forward.1} parent=0 // pred_region
    _
  $region17: #{mlp_forward.1} parent=0 // pred_fallthru
    _
  // Predicated region
  $region18: #{mlp_forward.1} parent=0 // pred_check
    _
  $region19: #{mlp_forward.1} parent=0 // pred_check_branch
    %20 = sbr.rel (0) target = $region21
  $region20: #{mlp_forward.1} parent=0 // pred_region
    _
  $region21: #{mlp_forward.1} parent=0 // pred_fallthru
    _
  // Predicated region
  $region22: #{mlp_forward.1} parent=0 // pred_check
    _
  $region23: #{mlp_forward.1} parent=0 // pred_check_branch
    %22 = sbr.rel (0) target = $region25
  $region24: #{mlp_forward.1} parent=0 // pred_region
    _
  $region25: #{mlp_forward.1} parent=0 // pred_fallthru
    _
  %v24 = vld [vmem:[%s1] sm:$0xf]
  %v25 = vld [vmem:[%s1 + $0x4] sm:$0xf]
  %v26 = vld [vmem:[%s1 + $0x8] sm:$0xf]
  %v27 = vld [vmem:[%s1 + $0xc] sm:$0xf]
  %v28 = vld [vmem:[%s1 + $0x10] sm:$0xf]
  %v29 = vld [vmem:[%s1 + $0x14] sm:$0xf]
  %v30 = vld [vmem:[%s1 + $0x18] sm:$0xf]
  %v31 = vld [vmem:[%s1 + $0x1c] sm:$0xf]
  %v32 = vld [vmem:[%s1 + $0x20] sm:$0xf]
  %v33 = vld [vmem:[%s1 + $0x24] sm:$0xf]
  %v34 = vld [vmem:[%s1 + $0x28] sm:$0xf]
  %v35 = vld [vmem:[%s1 + $0x2c] sm:$0xf]
  %v36 = vld [vmem:[%s1 + $0x30] sm:$0xf]
  %v37 = vld [vmem:[%s1 + $0x34] sm:$0xf]
  %v38 = vld [vmem:[%s1 + $0x38] sm:$0xf]
  %v39 = vld [vmem:[%s1 + $0x3c] sm:$0xf]
  %v40 = vld [vmem:[%s0] sm:$0xf]
  %v41 = vld [vmem:[%s0 + $0x4] sm:$0xf]
  %v58 = vunpack.c.l.b16 %v24
  %v59 = vunpack.c.l.b16 %v25
  %v60 = vunpack.c.l.b16 %v26
  %v61 = vunpack.c.l.b16 %v27
  %v62 = vunpack.c.l.b16 %v28
  %v63 = vunpack.c.l.b16 %v29
  %v64 = vunpack.c.l.b16 %v30
  %v65 = vunpack.c.l.b16 %v31
  %v66 = vunpack.c.l.b16 %v32
  %v67 = vunpack.c.l.b16 %v33
  %v68 = vunpack.c.l.b16 %v34
  %v69 = vunpack.c.l.b16 %v35
  %v70 = vunpack.c.l.b16 %v36
  %v71 = vunpack.c.l.b16 %v37
  %v72 = vunpack.c.l.b16 %v38
  %v73 = vunpack.c.l.b16 %v39
  %v74 = vpack.c.b16 %v59, %v58
  %v75 = vpack.c.b16 %v61, %v60
  %v76 = vpack.c.b16 %v63, %v62
  %v77 = vpack.c.b16 %v65, %v64
  %v78 = vpack.c.b16 %v67, %v66
  %v79 = vpack.c.b16 %v69, %v68
  %v80 = vpack.c.b16 %v71, %v70
  %v81 = vpack.c.b16 %v73, %v72
  %v84 = vunpack.c.l.b16 %v40
  %v85 = vunpack.c.l.b16 %v41
  %v86 = vpack.c.b16 %v85, %v84
  %vm88 = vcmask 130048
  %v90 = vsel %vm88, %v74, 0
  %v93 = vsel %vm88, %v75, 0
  %v96 = vsel %vm88, %v76, 0
  %v99 = vsel %vm88, %v77, 0
  %v102 = vsel %vm88, %v78, 0
  %v105 = vsel %vm88, %v79, 0
  %v108 = vsel %vm88, %v80, 0
  %v111 = vsel %vm88, %v81, 0
  %113 = vmatprep.subr.bf16.mxu0 0
  %114 = vmatpush1.bf16.msra.mxu0 %v86
  %115 = vmatprep.subr.bf16.mxu0 0
  %116 = vmatpush1.bf16.msra.mxu0 0
  %117 = vmatprep.subr.bf16.mxu0 0
  %118 = vmatpush1.bf16.msra.mxu0 0
  %119 = vmatprep.subr.bf16.mxu0 0
  %120 = vmatpush1.bf16.msra.mxu0 0
  %121 = vmatprep.subr.bf16.mxu0 0
  %122 = vmatpush1.bf16.msra.mxu0 0
  %123 = vmatprep.subr.bf16.mxu0 0
  %124 = vmatpush1.bf16.msra.mxu0 0
  %125 = vmatprep.subr.bf16.mxu0 0
  %126 = vmatpush1.bf16.msra.mxu0 0
  %127 = vmatprep.subr.bf16.mxu0 0
  %128 = vmatpush1.bf16.msra.mxu0 0
  %129 = vmatprep.subr.bf16.mxu0 0
  %130 = vmatpush1.bf16.msra.mxu0 0
  %131 = vmatprep.subr.bf16.mxu0 0
  %132 = vmatpush1.bf16.msra.mxu0 0
  %133 = vmatprep.subr.bf16.mxu0 0
  %134 = vmatpush1.bf16.msra.mxu0 0
  %135 = vmatprep.subr.bf16.mxu0 0
  %136 = vmatpush1.bf16.msra.mxu0 0
  %137 = vmatprep.subr.bf16.mxu0 0
  %138 = vmatpush1.bf16.msra.mxu0 0
  %139 = vmatprep.subr.bf16.mxu0 0
  %140 = vmatpush1.bf16.msra.mxu0 0
  %141 = vmatprep.subr.bf16.mxu0 0
  %142 = vmatpush1.bf16.msra.mxu0 0
  %143 = vmatprep.subr.bf16.mxu0 0
  %144 = vmatpush1.bf16.msra.mxu0 0
  %145 = vmatprep.mubr.bf16.mxu0 0
  %146 = vmatmul.mubr.bf16.gmra.mrb[0].mxu0 %v90
  %v147 = vpop.f32.mrb[0].mxu0
  %v148 = vadd.f32 0.0, %v147
  %v149 = vpop.f32.mrb[0].mxu0
  %v150 = vpop.f32.mrb[0].mxu0
  %v151 = vadd.f32 0.0, %v150
  %v152 = vpop.f32.mrb[0].mxu0
  %153 = vmatprep.mubr.bf16.mxu0 0
  %154 = vmatmul.mubr.bf16.gmra.mrb[0].mxu0 %v93
  %v155 = vpop.f32.mrb[0].mxu0
  %v156 = vadd.f32 0.0, %v155
  %v157 = vpop.f32.mrb[0].mxu0
  %v158 = vpop.f32.mrb[0].mxu0
  %v159 = vadd.f32 0.0, %v158
  %v160 = vpop.f32.mrb[0].mxu0
  %161 = vmatprep.mubr.bf16.mxu0 0
  %162 = vmatmul.mubr.bf16.gmra.mrb[0].mxu0 %v96
  %v163 = vpop.f32.mrb[0].mxu0
  %v164 = vadd.f32 0.0, %v163
  %v165 = vpop.f32.mrb[0].mxu0
  %v166 = vpop.f32.mrb[0].mxu0
  %v167 = vadd.f32 0.0, %v166
  %v168 = vpop.f32.mrb[0].mxu0
  %169 = vmatprep.mubr.bf16.mxu0 0
  %170 = vmatmul.mubr.bf16.gmra.mrb[0].mxu0 %v99
  %v171 = vpop.f32.mrb[0].mxu0
  %v172 = vadd.f32 0.0, %v171
  %v173 = vpop.f32.mrb[0].mxu0
  %v174 = vpop.f32.mrb[0].mxu0
  %v175 = vadd.f32 0.0, %v174
  %v176 = vpop.f32.mrb[0].mxu0
  %177 = vmatprep.mubr.bf16.mxu0 0
  %178 = vmatmul.mubr.bf16.gmra.mrb[0].mxu0 %v102
  %v179 = vpop.f32.mrb[0].mxu0
  %v180 = vadd.f32 0.0, %v179
  %v181 = vpop.f32.mrb[0].mxu0
  %v182 = vpop.f32.mrb[0].mxu0
  %v183 = vadd.f32 0.0, %v182
  %v184 = vpop.f32.mrb[0].mxu0
  %185 = vmatprep.mubr.bf16.mxu0 0
  %186 = vmatmul.mubr.bf16.gmra.mrb[0].mxu0 %v105
  %v187 = vpop.f32.mrb[0].mxu0
  %v188 = vadd.f32 0.0, %v187
  %v189 = vpop.f32.mrb[0].mxu0
  %v190 = vpop.f32.mrb[0].mxu0
  %v191 = vadd.f32 0.0, %v190
  %v192 = vpop.f32.mrb[0].mxu0
  %193 = vmatprep.mubr.bf16.mxu0 0
  %194 = vmatmul.mubr.bf16.gmra.mrb[0].mxu0 %v108
  %v195 = vpop.f32.mrb[0].mxu0
  %v196 = vadd.f32 0.0, %v195
  %v197 = vpop.f32.mrb[0].mxu0
  %v198 = vpop.f32.mrb[0].mxu0
  %v199 = vadd.f32 0.0, %v198
  %v200 = vpop.f32.mrb[0].mxu0
  %201 = vmatprep.mubr.bf16.mxu0 0
  %202 = vmatmul.mubr.bf16.gmra.mrb[0].mxu0 %v111
  %v203 = vpop.f32.mrb[0].mxu0
  %v204 = vadd.f32 0.0, %v203
  %v205 = vpop.f32.mrb[0].mxu0
  %v206 = vpop.f32.mrb[0].mxu0
  %v207 = vadd.f32 0.0, %v206
  %v208 = vpop.f32.mrb[0].mxu0
  %209 = vdwg.mxu0
  %v210 = vmax.f32 %v148, 0.0
  %v211 = vmax.f32 %v151, 0.0
  %v212 = vmax.f32 %v156, 0.0
  %v213 = vmax.f32 %v159, 0.0
  %v214 = vmax.f32 %v164, 0.0
  %v215 = vmax.f32 %v167, 0.0
  %v216 = vmax.f32 %v172, 0.0
  %v217 = vmax.f32 %v175, 0.0
  %v218 = vmax.f32 %v180, 0.0
  %v219 = vmax.f32 %v183, 0.0
  %v220 = vmax.f32 %v188, 0.0
  %v221 = vmax.f32 %v191, 0.0
  %v222 = vmax.f32 %v196, 0.0
  %v223 = vmax.f32 %v199, 0.0
  %v224 = vmax.f32 %v204, 0.0
  %v225 = vmax.f32 %v207, 0.0
  %v226 = vpack.c.bf16 %v211, %v210
  %v227 = vpack.c.bf16 %v213, %v212
  %v228 = vpack.c.bf16 %v215, %v214
  %v229 = vpack.c.bf16 %v217, %v216
  %v230 = vpack.c.bf16 %v219, %v218
  %v231 = vpack.c.bf16 %v221, %v220
  %v232 = vpack.c.bf16 %v223, %v222
  %v233 = vpack.c.bf16 %v225, %v224
  %v234 = vld [vmem:[%s2] sm:$0xf]
  %v235 = vld [vmem:[%s2 + $0x4] sm:$0xf]
  %v236 = vld [vmem:[%s2 + $0x8] sm:$0xf]
  %v237 = vld [vmem:[%s2 + $0xc] sm:$0xf]
  %v238 = vld [vmem:[%s2 + $0x10] sm:$0xf]
  %v239 = vld [vmem:[%s2 + $0x14] sm:$0xf]
  %v240 = vld [vmem:[%s2 + $0x18] sm:$0xf]
  %v241 = vld [vmem:[%s2 + $0x1c] sm:$0xf]
  %v242 = vld [vmem:[%s2 + $0x20] sm:$0xf]
  %v243 = vld [vmem:[%s2 + $0x24] sm:$0xf]
  %v244 = vld [vmem:[%s2 + $0x28] sm:$0xf]
  %v245 = vld [vmem:[%s2 + $0x2c] sm:$0xf]
  %v246 = vld [vmem:[%s2 + $0x30] sm:$0xf]
  %v247 = vld [vmem:[%s2 + $0x34] sm:$0xf]
  %v248 = vld [vmem:[%s2 + $0x38] sm:$0xf]
  %v249 = vld [vmem:[%s2 + $0x3c] sm:$0xf]
  %v250 = vld [vmem:[%s5] sm:$0xff]
  %v251 = vld [vmem:[%s5 + $0x8] sm:$0xff]
  %v252 = vld [vmem:[%s5 + $0x10] sm:$0xff]
  %v253 = vld [vmem:[%s5 + $0x18] sm:$0xff]
  %v254 = vld [vmem:[%s5 + $0x20] sm:$0xff]
  %v255 = vld [vmem:[%s5 + $0x28] sm:$0xff]
  %v256 = vld [vmem:[%s5 + $0x30] sm:$0xff]
  %v257 = vld [vmem:[%s5 + $0x38] sm:$0xff]
  %v258 = vld [vmem:[%s5 + $0x40] sm:$0xff]
  %v259 = vld [vmem:[%s5 + $0x48] sm:$0xff]
  %v260 = vld [vmem:[%s5 + $0x50] sm:$0xff]
  %v261 = vld [vmem:[%s5 + $0x58] sm:$0xff]
  %v262 = vld [vmem:[%s5 + $0x60] sm:$0xff]
  %v263 = vld [vmem:[%s5 + $0x68] sm:$0xff]
  %v264 = vld [vmem:[%s5 + $0x70] sm:$0xff]
  %v265 = vld [vmem:[%s5 + $0x78] sm:$0xff]
  %267 = vset.pattern.permute.xlu0 0
  %268 = vperm.xlu0 %267, %v250
  %v269 = vpop.permute.xlu0 %268
  %272 = vset.pattern.permute.xlu0 0
  %273 = vperm.xlu0 %272, %v251
  %v274 = vpop.permute.xlu0 %273
  %277 = vset.pattern.permute.xlu0 0
  %278 = vperm.xlu0 %277, %v252
  %v279 = vpop.permute.xlu0 %278
  %282 = vset.pattern.permute.xlu0 0
  %283 = vperm.xlu0 %282, %v253
  %v284 = vpop.permute.xlu0 %283
  %287 = vset.pattern.permute.xlu0 0
  %288 = vperm.xlu0 %287, %v254
  %v289 = vpop.permute.xlu0 %288
  %292 = vset.pattern.permute.xlu0 0
  %293 = vperm.xlu0 %292, %v255
  %v294 = vpop.permute.xlu0 %293
  %297 = vset.pattern.permute.xlu0 0
  %298 = vperm.xlu0 %297, %v256
  %v299 = vpop.permute.xlu0 %298
  %302 = vset.pattern.permute.xlu0 0
  %303 = vperm.xlu0 %302, %v257
  %v304 = vpop.permute.xlu0 %303
  %307 = vset.pattern.permute.xlu0 0
  %308 = vperm.xlu0 %307, %v258
  %v309 = vpop.permute.xlu0 %308
  %312 = vset.pattern.permute.xlu0 0
  %313 = vperm.xlu0 %312, %v259
  %v314 = vpop.permute.xlu0 %313
  %317 = vset.pattern.permute.xlu0 0
  %318 = vperm.xlu0 %317, %v260
  %v319 = vpop.permute.xlu0 %318
  %322 = vset.pattern.permute.xlu0 0
  %323 = vperm.xlu0 %322, %v261
  %v324 = vpop.permute.xlu0 %323
  %327 = vset.pattern.permute.xlu0 0
  %328 = vperm.xlu0 %327, %v262
  %v329 = vpop.permute.xlu0 %328
  %332 = vset.pattern.permute.xlu0 0
  %333 = vperm.xlu0 %332, %v263
  %v334 = vpop.permute.xlu0 %333
  %337 = vset.pattern.permute.xlu0 0
  %338 = vperm.xlu0 %337, %v264
  %v339 = vpop.permute.xlu0 %338
  %342 = vset.pattern.permute.xlu0 0
  %343 = vperm.xlu0 %342, %v265
  %v344 = vpop.permute.xlu0 %343
  %v362 = vunpack.c.l.b16 %v234
  %v363 = vunpack.c.l.b16 %v235
  %v364 = vunpack.c.l.b16 %v236
  %v365 = vunpack.c.l.b16 %v237
  %v366 = vunpack.c.l.b16 %v238
  %v367 = vunpack.c.l.b16 %v239
  %v368 = vunpack.c.l.b16 %v240
  %v369 = vunpack.c.l.b16 %v241
  %v370 = vunpack.c.l.b16 %v242
  %v371 = vunpack.c.l.b16 %v243
  %v372 = vunpack.c.l.b16 %v244
  %v373 = vunpack.c.l.b16 %v245
  %v374 = vunpack.c.l.b16 %v246
  %v375 = vunpack.c.l.b16 %v247
  %v376 = vunpack.c.l.b16 %v248
  %v377 = vunpack.c.l.b16 %v249
  %v378 = vpack.c.b16 %v363, %v362
  %v379 = vpack.c.b16 %v365, %v364
  %v380 = vpack.c.b16 %v367, %v366
  %v381 = vpack.c.b16 %v369, %v368
  %v382 = vpack.c.b16 %v371, %v370
  %v383 = vpack.c.b16 %v373, %v372
  %v384 = vpack.c.b16 %v375, %v374
  %v385 = vpack.c.b16 %v377, %v376
  %394 = vmatprep.subr.bf16.mxu0 0
  %395 = vmatpush1.bf16.msra.mxu0 %v226
  %396 = vmatprep.subr.bf16.mxu0 0
  %397 = vmatpush1.bf16.msra.mxu0 %v227
  %398 = vmatprep.subr.bf16.mxu0 0
  %399 = vmatpush1.bf16.msra.mxu0 %v228
  %400 = vmatprep.subr.bf16.mxu0 0
  %401 = vmatpush1.bf16.msra.mxu0 %v229
  %402 = vmatprep.subr.bf16.mxu0 0
  %403 = vmatpush1.bf16.msra.mxu0 %v230
  %404 = vmatprep.subr.bf16.mxu0 0
  %405 = vmatpush1.bf16.msra.mxu0 %v231
  %406 = vmatprep.subr.bf16.mxu0 0
  %407 = vmatpush1.bf16.msra.mxu0 %v232
  %408 = vmatprep.subr.bf16.mxu0 0
  %409 = vmatpush1.bf16.msra.mxu0 %v233
  %410 = vmatprep.subr.bf16.mxu0 0
  %411 = vmatpush1.bf16.msra.mxu0 0
  %412 = vmatprep.subr.bf16.mxu0 0
  %413 = vmatpush1.bf16.msra.mxu0 0
  %414 = vmatprep.subr.bf16.mxu0 0
  %415 = vmatpush1.bf16.msra.mxu0 0
  %416 = vmatprep.subr.bf16.mxu0 0
  %417 = vmatpush1.bf16.msra.mxu0 0
  %418 = vmatprep.subr.bf16.mxu0 0
  %419 = vmatpush1.bf16.msra.mxu0 0
  %420 = vmatprep.subr.bf16.mxu0 0
  %421 = vmatpush1.bf16.msra.mxu0 0
  %422 = vmatprep.subr.bf16.mxu0 0
  %423 = vmatpush1.bf16.msra.mxu0 0
  %424 = vmatprep.subr.bf16.mxu0 0
  %425 = vmatpush1.bf16.msra.mxu0 0
  %426 = vmatprep.mubr.bf16.mxu0 0
  %427 = vmatmul.mubr.bf16.gmra.mrb[0].mxu0 %v378
  %v428 = vpop.f32.mrb[0].mxu0
  %v429 = vadd.f32 %v269, %v428
  %v430 = vpop.f32.mrb[0].mxu0
  %v431 = vpop.f32.mrb[0].mxu0
  %v432 = vadd.f32 %v274, %v431
  %v433 = vpop.f32.mrb[0].mxu0
  %434 = vmatprep.mubr.bf16.mxu0 0
  %435 = vmatmul.mubr.bf16.gmra.mrb[0].mxu0 %v379
  %v436 = vpop.f32.mrb[0].mxu0
  %v437 = vadd.f32 %v279, %v436
  %v438 = vpop.f32.mrb[0].mxu0
  %v439 = vpop.f32.mrb[0].mxu0
  %v440 = vadd.f32 %v284, %v439
  %v441 = vpop.f32.mrb[0].mxu0
  %442 = vmatprep.mubr.bf16.mxu0 0
  %443 = vmatmul.mubr.bf16.gmra.mrb[0].mxu0 %v380
  %v444 = vpop.f32.mrb[0].mxu0
  %v445 = vadd.f32 %v289, %v444
  %v446 = vpop.f32.mrb[0].mxu0
  %v447 = vpop.f32.mrb[0].mxu0
  %v448 = vadd.f32 %v294, %v447
  %v449 = vpop.f32.mrb[0].mxu0
  %450 = vmatprep.mubr.bf16.mxu0 0
  %451 = vmatmul.mubr.bf16.gmra.mrb[0].mxu0 %v381
  %v452 = vpop.f32.mrb[0].mxu0
  %v453 = vadd.f32 %v299, %v452
  %v454 = vpop.f32.mrb[0].mxu0
  %v455 = vpop.f32.mrb[0].mxu0
  %v456 = vadd.f32 %v304, %v455
  %v457 = vpop.f32.mrb[0].mxu0
  %458 = vmatprep.mubr.bf16.mxu0 0
  %459 = vmatmul.mubr.bf16.gmra.mrb[0].mxu0 %v382
  %v460 = vpop.f32.mrb[0].mxu0
  %v461 = vadd.f32 %v309, %v460
  %v462 = vpop.f32.mrb[0].mxu0
  %v463 = vpop.f32.mrb[0].mxu0
  %v464 = vadd.f32 %v314, %v463
  %v465 = vpop.f32.mrb[0].mxu0
  %466 = vmatprep.mubr.bf16.mxu0 0
  %467 = vmatmul.mubr.bf16.gmra.mrb[0].mxu0 %v383
  %v468 = vpop.f32.mrb[0].mxu0
  %v469 = vadd.f32 %v319, %v468
  %v470 = vpop.f32.mrb[0].mxu0
  %v471 = vpop.f32.mrb[0].mxu0
  %v472 = vadd.f32 %v324, %v471
  %v473 = vpop.f32.mrb[0].mxu0
  %474 = vmatprep.mubr.bf16.mxu0 0
  %475 = vmatmul.mubr.bf16.gmra.mrb[0].mxu0 %v384
  %v476 = vpop.f32.mrb[0].mxu0
  %v477 = vadd.f32 %v329, %v476
  %v478 = vpop.f32.mrb[0].mxu0
  %v479 = vpop.f32.mrb[0].mxu0
  %v480 = vadd.f32 %v334, %v479
  %v481 = vpop.f32.mrb[0].mxu0
  %482 = vmatprep.mubr.bf16.mxu0 0
  %483 = vmatmul.mubr.bf16.gmra.mrb[0].mxu0 %v385
  %v484 = vpop.f32.mrb[0].mxu0
  %v485 = vadd.f32 %v339, %v484
  %v486 = vpop.f32.mrb[0].mxu0
  %v487 = vpop.f32.mrb[0].mxu0
  %v488 = vadd.f32 %v344, %v487
  %v489 = vpop.f32.mrb[0].mxu0
  %490 = vdwg.mxu0
  %v491 = vmax.f32 %v429, 0.0
  %v492 = vmax.f32 %v432, 0.0
  %v493 = vmax.f32 %v437, 0.0
  %v494 = vmax.f32 %v440, 0.0
  %v495 = vmax.f32 %v445, 0.0
  %v496 = vmax.f32 %v448, 0.0
  %v497 = vmax.f32 %v453, 0.0
  %v498 = vmax.f32 %v456, 0.0
  %v499 = vmax.f32 %v461, 0.0
  %v500 = vmax.f32 %v464, 0.0
  %v501 = vmax.f32 %v469, 0.0
  %v502 = vmax.f32 %v472, 0.0
  %v503 = vmax.f32 %v477, 0.0
  %v504 = vmax.f32 %v480, 0.0
  %v505 = vmax.f32 %v485, 0.0
  %v506 = vmax.f32 %v488, 0.0
  %v507 = vpack.c.bf16 %v492, %v491
  %v508 = vpack.c.bf16 %v494, %v493
  %v509 = vpack.c.bf16 %v496, %v495
  %v510 = vpack.c.bf16 %v498, %v497
  %v511 = vpack.c.bf16 %v500, %v499
  %v512 = vpack.c.bf16 %v502, %v501
  %v513 = vpack.c.bf16 %v504, %v503
  %v514 = vpack.c.bf16 %v506, %v505
  %v515 = vld [vmem:[%s3] sm:$0xf]
  %v516 = vld [vmem:[%s3 + $0x4] sm:$0xf]
  %v517 = vld [vmem:[%s3 + $0x8] sm:$0xf]
  %v518 = vld [vmem:[%s3 + $0xc] sm:$0xf]
  %v519 = vld [vmem:[%s3 + $0x10] sm:$0xf]
  %v520 = vld [vmem:[%s3 + $0x14] sm:$0xf]
  %v521 = vld [vmem:[%s3 + $0x18] sm:$0xf]
  %v522 = vld [vmem:[%s3 + $0x1c] sm:$0xf]
  %v523 = vld [vmem:[%s3 + $0x20] sm:$0xf]
  %v524 = vld [vmem:[%s3 + $0x24] sm:$0xf]
  %v525 = vld [vmem:[%s3 + $0x28] sm:$0xf]
  %v526 = vld [vmem:[%s3 + $0x2c] sm:$0xf]
  %v527 = vld [vmem:[%s3 + $0x30] sm:$0xf]
  %v528 = vld [vmem:[%s3 + $0x34] sm:$0xf]
  %v529 = vld [vmem:[%s3 + $0x38] sm:$0xf]
  %v530 = vld [vmem:[%s3 + $0x3c] sm:$0xf]
  %531 = vset.pattern.permute.xlu0 1
  %532 = vperm.xlu0 %531, %v250
  %v533 = vpop.permute.xlu0 %532
  %535 = vset.pattern.permute.xlu0 1
  %536 = vperm.xlu0 %535, %v251
  %v537 = vpop.permute.xlu0 %536
  %539 = vset.pattern.permute.xlu0 1
  %540 = vperm.xlu0 %539, %v252
  %v541 = vpop.permute.xlu0 %540
  %543 = vset.pattern.permute.xlu0 1
  %544 = vperm.xlu0 %543, %v253
  %v545 = vpop.permute.xlu0 %544
  %547 = vset.pattern.permute.xlu0 1
  %548 = vperm.xlu0 %547, %v254
  %v549 = vpop.permute.xlu0 %548
  %551 = vset.pattern.permute.xlu0 1
  %552 = vperm.xlu0 %551, %v255
  %v553 = vpop.permute.xlu0 %552
  %555 = vset.pattern.permute.xlu0 1
  %556 = vperm.xlu0 %555, %v256
  %v557 = vpop.permute.xlu0 %556
  %559 = vset.pattern.permute.xlu0 1
  %560 = vperm.xlu0 %559, %v257
  %v561 = vpop.permute.xlu0 %560
  %563 = vset.pattern.permute.xlu0 1
  %564 = vperm.xlu0 %563, %v258
  %v565 = vpop.permute.xlu0 %564
  %567 = vset.pattern.permute.xlu0 1
  %568 = vperm.xlu0 %567, %v259
  %v569 = vpop.permute.xlu0 %568
  %571 = vset.pattern.permute.xlu0 1
  %572 = vperm.xlu0 %571, %v260
  %v573 = vpop.permute.xlu0 %572
  %575 = vset.pattern.permute.xlu0 1
  %576 = vperm.xlu0 %575, %v261
  %v577 = vpop.permute.xlu0 %576
  %579 = vset.pattern.permute.xlu0 1
  %580 = vperm.xlu0 %579, %v262
  %v581 = vpop.permute.xlu0 %580
  %583 = vset.pattern.permute.xlu0 1
  %584 = vperm.xlu0 %583, %v263
  %v585 = vpop.permute.xlu0 %584
  %587 = vset.pattern.permute.xlu0 1
  %588 = vperm.xlu0 %587, %v264
  %v589 = vpop.permute.xlu0 %588
  %591 = vset.pattern.permute.xlu0 1
  %592 = vperm.xlu0 %591, %v265
  %v593 = vpop.permute.xlu0 %592
  %v611 = vunpack.c.l.b16 %v515
  %v612 = vunpack.c.l.b16 %v516
  %v613 = vunpack.c.l.b16 %v517
  %v614 = vunpack.c.l.b16 %v518
  %v615 = vunpack.c.l.b16 %v519
  %v616 = vunpack.c.l.b16 %v520
  %v617 = vunpack.c.l.b16 %v521
  %v618 = vunpack.c.l.b16 %v522
  %v619 = vunpack.c.l.b16 %v523
  %v620 = vunpack.c.l.b16 %v524
  %v621 = vunpack.c.l.b16 %v525
  %v622 = vunpack.c.l.b16 %v526
  %v623 = vunpack.c.l.b16 %v527
  %v624 = vunpack.c.l.b16 %v528
  %v625 = vunpack.c.l.b16 %v529
  %v626 = vunpack.c.l.b16 %v530
  %v627 = vpack.c.b16 %v612, %v611
  %v628 = vpack.c.b16 %v614, %v613
  %v629 = vpack.c.b16 %v616, %v615
  %v630 = vpack.c.b16 %v618, %v617
  %v631 = vpack.c.b16 %v620, %v619
  %v632 = vpack.c.b16 %v622, %v621
  %v633 = vpack.c.b16 %v624, %v623
  %v634 = vpack.c.b16 %v626, %v625
  %643 = vmatprep.subr.bf16.mxu0 0
  %644 = vmatpush1.bf16.msra.mxu0 %v507
  %645 = vmatprep.subr.bf16.mxu0 0
  %646 = vmatpush1.bf16.msra.mxu0 %v508
  %647 = vmatprep.subr.bf16.mxu0 0
  %648 = vmatpush1.bf16.msra.mxu0 %v509
  %649 = vmatprep.subr.bf16.mxu0 0
  %650 = vmatpush1.bf16.msra.mxu0 %v510
  %651 = vmatprep.subr.bf16.mxu0 0
  %652 = vmatpush1.bf16.msra.mxu0 %v511
  %653 = vmatprep.subr.bf16.mxu0 0
  %654 = vmatpush1.bf16.msra.mxu0 %v512
  %655 = vmatprep.subr.bf16.mxu0 0
  %656 = vmatpush1.bf16.msra.mxu0 %v513
  %657 = vmatprep.subr.bf16.mxu0 0
  %658 = vmatpush1.bf16.msra.mxu0 %v514
  %659 = vmatprep.subr.bf16.mxu0 0
  %660 = vmatpush1.bf16.msra.mxu0 0
  %661 = vmatprep.subr.bf16.mxu0 0
  %662 = vmatpush1.bf16.msra.mxu0 0
  %663 = vmatprep.subr.bf16.mxu0 0
  %664 = vmatpush1.bf16.msra.mxu0 0
  %665 = vmatprep.subr.bf16.mxu0 0
  %666 = vmatpush1.bf16.msra.mxu0 0
  %667 = vmatprep.subr.bf16.mxu0 0
  %668 = vmatpush1.bf16.msra.mxu0 0
  %669 = vmatprep.subr.bf16.mxu0 0
  %670 = vmatpush1.bf16.msra.mxu0 0
  %671 = vmatprep.subr.bf16.mxu0 0
  %672 = vmatpush1.bf16.msra.mxu0 0
  %673 = vmatprep.subr.bf16.mxu0 0
  %674 = vmatpush1.bf16.msra.mxu0 0
  %675 = vmatprep.mubr.bf16.mxu0 0
  %676 = vmatmul.mubr.bf16.gmra.mrb[0].mxu0 %v627
  %v677 = vpop.f32.mrb[0].mxu0
  %v678 = vadd.f32 %v533, %v677
  %v679 = vpop.f32.mrb[0].mxu0
  %v680 = vpop.f32.mrb[0].mxu0
  %v681 = vadd.f32 %v537, %v680
  %v682 = vpop.f32.mrb[0].mxu0
  %683 = vmatprep.mubr.bf16.mxu0 0
  %684 = vmatmul.mubr.bf16.gmra.mrb[0].mxu0 %v628
  %v685 = vpop.f32.mrb[0].mxu0
  %v686 = vadd.f32 %v541, %v685
  %v687 = vpop.f32.mrb[0].mxu0
  %v688 = vpop.f32.mrb[0].mxu0
  %v689 = vadd.f32 %v545, %v688
  %v690 = vpop.f32.mrb[0].mxu0
  %691 = vmatprep.mubr.bf16.mxu0 0
  %692 = vmatmul.mubr.bf16.gmra.mrb[0].mxu0 %v629
  %v693 = vpop.f32.mrb[0].mxu0
  %v694 = vadd.f32 %v549, %v693
  %v695 = vpop.f32.mrb[0].mxu0
  %v696 = vpop.f32.mrb[0].mxu0
  %v697 = vadd.f32 %v553, %v696
  %v698 = vpop.f32.mrb[0].mxu0
  %699 = vmatprep.mubr.bf16.mxu0 0
  %700 = vmatmul.mubr.bf16.gmra.mrb[0].mxu0 %v630
  %v701 = vpop.f32.mrb[0].mxu0
  %v702 = vadd.f32 %v557, %v701
  %v703 = vpop.f32.mrb[0].mxu0
  %v704 = vpop.f32.mrb[0].mxu0
  %v705 = vadd.f32 %v561, %v704
  %v706 = vpop.f32.mrb[0].mxu0
  %707 = vmatprep.mubr.bf16.mxu0 0
  %708 = vmatmul.mubr.bf16.gmra.mrb[0].mxu0 %v631
  %v709 = vpop.f32.mrb[0].mxu0
  %v710 = vadd.f32 %v565, %v709
  %v711 = vpop.f32.mrb[0].mxu0
  %v712 = vpop.f32.mrb[0].mxu0
  %v713 = vadd.f32 %v569, %v712
  %v714 = vpop.f32.mrb[0].mxu0
  %715 = vmatprep.mubr.bf16.mxu0 0
  %716 = vmatmul.mubr.bf16.gmra.mrb[0].mxu0 %v632
  %v717 = vpop.f32.mrb[0].mxu0
  %v718 = vadd.f32 %v573, %v717
  %v719 = vpop.f32.mrb[0].mxu0
  %v720 = vpop.f32.mrb[0].mxu0
  %v721 = vadd.f32 %v577, %v720
  %v722 = vpop.f32.mrb[0].mxu0
  %723 = vmatprep.mubr.bf16.mxu0 0
  %724 = vmatmul.mubr.bf16.gmra.mrb[0].mxu0 %v633
  %v725 = vpop.f32.mrb[0].mxu0
  %v726 = vadd.f32 %v581, %v725
  %v727 = vpop.f32.mrb[0].mxu0
  %v728 = vpop.f32.mrb[0].mxu0
  %v729 = vadd.f32 %v585, %v728
  %v730 = vpop.f32.mrb[0].mxu0
  %731 = vmatprep.mubr.bf16.mxu0 0
  %732 = vmatmul.mubr.bf16.gmra.mrb[0].mxu0 %v634
  %v733 = vpop.f32.mrb[0].mxu0
  %v734 = vadd.f32 %v589, %v733
  %v735 = vpop.f32.mrb[0].mxu0
  %v736 = vpop.f32.mrb[0].mxu0
  %v737 = vadd.f32 %v593, %v736
  %v738 = vpop.f32.mrb[0].mxu0
  %739 = vdwg.mxu0
  %v740 = vmax.f32 %v678, 0.0
  %v741 = vmax.f32 %v681, 0.0
  %v742 = vmax.f32 %v686, 0.0
  %v743 = vmax.f32 %v689, 0.0
  %v744 = vmax.f32 %v694, 0.0
  %v745 = vmax.f32 %v697, 0.0
  %v746 = vmax.f32 %v702, 0.0
  %v747 = vmax.f32 %v705, 0.0
  %v748 = vmax.f32 %v710, 0.0
  %v749 = vmax.f32 %v713, 0.0
  %v750 = vmax.f32 %v718, 0.0
  %v751 = vmax.f32 %v721, 0.0
  %v752 = vmax.f32 %v726, 0.0
  %v753 = vmax.f32 %v729, 0.0
  %v754 = vmax.f32 %v734, 0.0
  %v755 = vmax.f32 %v737, 0.0
  %v756 = vpack.c.bf16 %v741, %v740
  %v757 = vpack.c.bf16 %v743, %v742
  %v758 = vpack.c.bf16 %v745, %v744
  %v759 = vpack.c.bf16 %v747, %v746
  %v760 = vpack.c.bf16 %v749, %v748
  %v761 = vpack.c.bf16 %v751, %v750
  %v762 = vpack.c.bf16 %v753, %v752
  %v763 = vpack.c.bf16 %v755, %v754
  %v764 = vld [vmem:[%s4] sm:$0x1]
  %v765 = vld [vmem:[%s5] sm:$0x1]
  %767 = vset.pattern.permute.xlu0 2
  %768 = vperm.xlu0 %767, %v765
  %v769 = vpop.permute.xlu0 %768
  %771 = vmatprep.subr.bf16.mxu0 0
  %772 = vmatpush1.bf16.msra.mxu0 %v756
  %773 = vmatprep.subr.bf16.mxu0 0
  %774 = vmatpush1.bf16.msra.mxu0 %v757
  %775 = vmatprep.subr.bf16.mxu0 0
  %776 = vmatpush1.bf16.msra.mxu0 %v758
  %777 = vmatprep.subr.bf16.mxu0 0
  %778 = vmatpush1.bf16.msra.mxu0 %v759
  %779 = vmatprep.subr.bf16.mxu0 0
  %780 = vmatpush1.bf16.msra.mxu0 %v760
  %781 = vmatprep.subr.bf16.mxu0 0
  %782 = vmatpush1.bf16.msra.mxu0 %v761
  %783 = vmatprep.subr.bf16.mxu0 0
  %784 = vmatpush1.bf16.msra.mxu0 %v762
  %785 = vmatprep.subr.bf16.mxu0 0
  %786 = vmatpush1.bf16.msra.mxu0 %v763
  %787 = vmatprep.subr.bf16.mxu0 0
  %788 = vmatpush1.bf16.msra.mxu0 0
  %789 = vmatprep.subr.bf16.mxu0 0
  %790 = vmatpush1.bf16.msra.mxu0 0
  %791 = vmatprep.subr.bf16.mxu0 0
  %792 = vmatpush1.bf16.msra.mxu0 0
  %793 = vmatprep.subr.bf16.mxu0 0
  %794 = vmatpush1.bf16.msra.mxu0 0
  %795 = vmatprep.subr.bf16.mxu0 0
  %796 = vmatpush1.bf16.msra.mxu0 0
  %797 = vmatprep.subr.bf16.mxu0 0
  %798 = vmatpush1.bf16.msra.mxu0 0
  %799 = vmatprep.subr.bf16.mxu0 0
  %800 = vmatpush1.bf16.msra.mxu0 0
  %801 = vmatprep.subr.bf16.mxu0 0
  %802 = vmatpush1.bf16.msra.mxu0 0
  %803 = vmatprep.mubr.bf16.mxu0 0
  %804 = vmatmul.mubr.bf16.gmra.mrb[0].mxu0 %v764
  %v805 = vpop.f32.mrb[0].mxu0
  %v806 = vadd.f32 %v769, %v805
  %v807 = vpop.f32.mrb[0].mxu0
  %v808 = vpop.f32.mrb[0].mxu0
  %v809 = vpop.f32.mrb[0].mxu0
  %810 = vdwg.mxu0
  %v811 = vtanh.pop %v806
  %vm812 = vcmask 122880
  %813 = vst.msk [vmem:[%s6] sm:$0x1] %vm812, %v811
  // Predicated region
  $region26: #{mlp_forward.1} parent=0 // pred_check
    _
  $region27: #{mlp_forward.1} parent=0 // pred_check_branch
    %815 = sbr.rel (0) target = $region29
  $region28: #{mlp_forward.1} parent=0 // pred_region
    _
  $region29: #{mlp_forward.1} parent=0 // pred_fallthru
    _
  // Predicated region
  $region30: #{mlp_forward.1} parent=0 // pred_check
    _
  $region31: #{mlp_forward.1} parent=0 // pred_check_branch
    %817 = sbr.rel (0) target = $region33
  $region32: #{mlp_forward.1} parent=0 // pred_region
    _
  $region33: #{mlp_forward.1} parent=0 // pred_fallthru
    _

</llo_original>
